<compile_context>
chip_gen: v6e
topology: v6e:2x2x1
jax: 0.10.0
libtpu: 0.0.40
codegen_flags: <defaults>
</compile_context>

<pallas_src>
import functools
import math

import jax
import jax.numpy as jnp
from jax import lax
from jax.experimental import pallas as pl
from jax.experimental.pallas import tpu as pltpu


def _round_up(x, m):
    return ((x + m - 1) // m) * m


def _vmem_limit():
    """~85% of physical VMEM (v5e/v6e: ~108 MiB, v7x: ~54 MiB)."""
    try:
        cap = pltpu.get_tpu_info().vmem_capacity_bytes
    except Exception:
        cap = 64 * 1024 * 1024
    return int(min(cap * 0.85, 112 * 1024 * 1024))


# ----------------------------------------------------------------------------
# Fused single-block path: the whole layer stack in one pallas_call.
# ----------------------------------------------------------------------------
def _gmel_fused_kernel(scal_ref, attr_ref, onehot_ref, bias_ref, dT_ref, *refs,
                       h_dim, num_layers):
    """refs = (wcat_0, asrc_0, ..., wcat_{L-1}, asrc_{L-1}, out_ref).

    wcat_l : (Fin_l, W) bf16, columns: [0:H]=W1, [H]=0 (denominator slot),
             [H+1]=W1@a_dst, [H+2:2H+2]=W2, rest 0.
    asrc_l : (1, H) f32  (a_src row of attn_fc.weight)
    scal_ref : SMEM (L, 1)  c_l = fc0_weight * a_e
    bias_ref : (N, N) bf16 additive mask (0 on edges, -1e30 otherwise),
               row = destination v, col = source u.
    dT_ref   : (N, N) bf16, d transposed (row = destination).
    """
    out_ref = refs[-1]
    w_refs = refs[:-1]
    onehot = onehot_ref[...]                                # (1, W): 1.0 at col H

    x = attr_ref[...]                                       # (N, Fin_0) f32
    for l in range(num_layers):                             # unrolled (small L)
        wcat = w_refs[2 * l][...]                           # (Fin, W) bf16
        asrc = w_refs[2 * l + 1][...]                       # (1, H)  f32
        c = scal_ref[l, 0]                                  # fc0_w * a_e

        # one MXU pass gives z, s_dst and z_i (bf16 operands, f32 accumulate)
        xc = jnp.dot(x.astype(jnp.bfloat16), wcat,
                     preferred_element_type=jnp.float32)    # (N, W)
        z = xc[:, :h_dim]                                   # (N, H)
        s_dst = xc[:, h_dim + 1:h_dim + 2]                  # (N, 1) = a_dst.z[v]
        z_i = xc[:, h_dim + 2:2 * h_dim + 2]                # (N, H)

        # s_src as a (1, N) lane row via a tiny MXU contraction (no transpose)
        s_src_row = lax.dot_general(asrc, z, (((1,), (1,)), ((), ())),
                                    preferred_element_type=jnp.float32)

        # e[v, u] = leaky_relu(a_src.z[u] + a_dst.z[v] + c * d[u, v]) + mask
        e = s_dst + s_src_row + c * dT_ref[...]             # bf16 d promotes to f32
        e = jnp.where(e > 0, e, jnp.float32(0.01) * e)      # F.leaky_relu
        e = e + bias_ref[...]                               # -1e30 off-edge

        # softmax over incoming edges (sources u = lane axis)
        e_max = jnp.max(e, axis=1, keepdims=True)           # (N, 1)
        ex = jnp.exp(e - e_max)                             # masked -> exactly 0

        # Denominator folded into the aggregation matmul: column H of agg_src
        # is the constant 1 (xc col H is exactly 0 by construction), so
        # aggr[:, :H] = sum_u ex*z  and  aggr[:, H] = sum_u ex  in ONE MXU pass.
        agg_src = (xc + onehot).astype(jnp.bfloat16)        # (N, W)
        aggr = jnp.dot(ex.astype(jnp.bfloat16), agg_src,
                       preferred_element_type=jnp.float32)  # (N, W)
        zn = aggr[:, :h_dim]
        denom = aggr[:, h_dim:h_dim + 1]
        inv = pl.reciprocal(denom, approx=True)             # EUP, free slot
        x = jnp.maximum(z_i + zn * inv, jnp.float32(0.0))   # relu -> next layer

    out_ref[...] = x.astype(out_ref.dtype)


def _gmel_fused(attr, dT_b, bias_b, layer_params, *, vmem_limit):
    n = attr.shape[0]
    h_dim = layer_params[0][0].shape[1]
    num_layers = len(layer_params)
    w_cols = _round_up(2 * h_dim + 2, 128)                  # lane-tile wide
    onehot = (jnp.arange(w_cols) == h_dim).astype(jnp.float32).reshape(1, w_cols)

    in_specs = [pl.BlockSpec(memory_space=pltpu.MemorySpace.SMEM)] + \
               [pl.BlockSpec(memory_space=pltpu.MemorySpace.VMEM)] * 4
    w_inputs, scal_rows = [], []
    for (w1, w2, attn, w0) in layer_params:
        f_in = w1.shape[0]
        a_src = attn[:h_dim, 0].reshape(1, h_dim).astype(jnp.float32)
        a_dst = attn[h_dim:2 * h_dim, 0:1]
        a_e = attn[2 * h_dim, 0]
        wcat = jnp.zeros((f_in, w_cols), jnp.float32)
        wcat = wcat.at[:, :h_dim].set(w1)                    # z
        wcat = wcat.at[:, h_dim + 1:h_dim + 2].set(w1 @ a_dst)  # s_dst
        wcat = wcat.at[:, h_dim + 2:2 * h_dim + 2].set(w2)   # z_i
        w_inputs.extend([wcat.astype(jnp.bfloat16), a_src])
        in_specs.extend([pl.BlockSpec(memory_space=pltpu.MemorySpace.VMEM)] * 2)
        scal_rows.append((w0[0, 0] * a_e).reshape(1))
    scal = jnp.stack(scal_rows).astype(jnp.float32)          # (L, 1) -> SMEM

    kernel = functools.partial(_gmel_fused_kernel, h_dim=h_dim,
                               num_layers=num_layers)
    return pl.pallas_call(
        kernel,
        out_shape=jax.ShapeDtypeStruct((n, h_dim), jnp.float32),
        in_specs=in_specs,
        out_specs=pl.BlockSpec(memory_space=pltpu.MemorySpace.VMEM),
        compiler_params=pltpu.CompilerParams(vmem_limit_bytes=vmem_limit),
    )(scal, attr, onehot, bias_b, dT_b, *w_inputs)


# ----------------------------------------------------------------------------
# Destination-row-tiled path: one pallas_call per layer, grid over row tiles.
# ----------------------------------------------------------------------------
def _gat_layer_tiled_kernel(c_ref, ssrc_ref, zaug_ref, zdst_ref, bias_ref,
                            dT_ref, out_ref, *, h_dim):
    c = c_ref[0, 0]
    zdst = zdst_ref[...]                                     # (TV, W): [z_i|0|s_dst|0..]
    s_dst = zdst[:, h_dim + 1:h_dim + 2]                     # (TV, 1)

    e = s_dst + ssrc_ref[...] + c * dT_ref[...]              # (TV, N) f32
    e = jnp.where(e > 0, e, jnp.float32(0.01) * e)           # leaky_relu
    e = e + bias_ref[...]                                    # mask non-edges
    e_max = jnp.max(e, axis=1, keepdims=True)
    ex = jnp.exp(e - e_max)                                  # masked -> 0

    # zaug columns: [0:H]=z sources, [H]=1 (denominator), rest 0.
    aggr = jnp.dot(ex.astype(jnp.bfloat16), zaug_ref[...],
                   preferred_element_type=jnp.float32)       # (TV, W)
    denom = aggr[:, h_dim:h_dim + 1]
    inv = pl.reciprocal(denom, approx=True)
    # Lane-dense full-width store; columns >= H carry harmless junk/zeros and
    # are sliced off by the wrapper.
    out_ref[...] = jnp.maximum(zdst + aggr * inv, jnp.float32(0.0))


def _gat_layer_tiled(x, dT_b, bias_b, w1, w2, attn, w0, *, tv, vmem_limit):
    n_pad = x.shape[0]
    h_dim = w1.shape[1]
    w_cols = _round_up(h_dim + 2, 128)

    a_src = attn[:h_dim, 0:1]
    a_dst = attn[h_dim:2 * h_dim, 0:1]
    a_e = attn[2 * h_dim, 0]
    c = (w0[0, 0] * a_e).reshape(1, 1).astype(jnp.float32)

    # Small dense transforms done wrapper-side (XLA); the N^2 work is in Pallas.
    z = x @ w1                                               # (N_pad, H)
    z_i = x @ w2
    s_dst = z @ a_dst                                        # (N_pad, 1)
    s_src_row = (z @ a_src).reshape(1, n_pad)                # (1, N_pad)

    tail = jnp.zeros((n_pad, w_cols - (h_dim + 2)), jnp.float32)
    z_aug = jnp.concatenate(
        [z, jnp.ones((n_pad, 1), jnp.float32),
         jnp.zeros((n_pad, 1), jnp.float32), tail], axis=1).astype(jnp.bfloat16)
    zdst = jnp.concatenate(
        [z_i, jnp.zeros((n_pad, 1), jnp.float32), s_dst, tail], axis=1)

    num_tiles = n_pad // tv
    out = pl.pallas_call(
        functools.partial(_gat_layer_tiled_kernel, h_dim=h_dim),
        out_shape=jax.ShapeDtypeStruct((n_pad, w_cols), jnp.float32),
        grid=(num_tiles,),
        in_specs=[
            pl.BlockSpec(memory_space=pltpu.MemorySpace.SMEM),     # c
            pl.BlockSpec((1, n_pad), lambda i: (0, 0)),            # s_src row
            pl.BlockSpec((n_pad, w_cols), lambda i: (0, 0)),       # z_aug (bf16)
            pl.BlockSpec((tv, w_cols), lambda i: (i, 0)),          # zdst tile
            pl.BlockSpec((tv, n_pad), lambda i: (i, 0)),           # bias tile (bf16)
            pl.BlockSpec((tv, n_pad), lambda i: (i, 0)),           # dT tile (bf16)
        ],
        out_specs=pl.BlockSpec((tv, w_cols), lambda i: (i, 0)),
        compiler_params=pltpu.CompilerParams(
            dimension_semantics=("parallel",),      # shards across v7x's 2 TCs
            vmem_limit_bytes=vmem_limit),
    )(c, s_src_row, z_aug, zdst, bias_b, dT_b)
    return out[:, :h_dim]


# ----------------------------------------------------------------------------
# Top-level forward (== GMELModel.forward(g)): GAT input layer + hidden layers.
# ----------------------------------------------------------------------------
def gmel_forward(attr, adj, d, layer_params, *, force_tiled=False, tile_rows=256):
    """layer_params: list of (w1, w2, attn, w0) with
      w1, w2 : (Fin, H)     = fc{1,2}.weight.T
      attn   : (2H + 1, 1)  = attn_fc.weight.T
      w0     : (1, 1)       = fc0.weight
    NOTE: destinations with zero in-degree produce NaN in the PyTorch/DGL
    reference (0/0 softmax); this kernel yields finite (meaningless) values
    for such rows instead.
    """
    n = attr.shape[0]
    vmem_limit = _vmem_limit()
    # Fused path keeps ~16 bytes/elem of (N,N) data live in VMEM; switch to the
    # tiled, pipelined path once that no longer fits comfortably.
    use_tiled = force_tiled or (16 * n * n > vmem_limit // 2)

    attr = attr.astype(jnp.float32)
    adjT = jnp.transpose(adj)         # row = destination v, col = source u
    dT = jnp.transpose(d)

    if not use_tiled:
        bias_b = jnp.where(adjT > 0, 0.0, -1e30).astype(jnp.bfloat16)
        dT_b = dT.astype(jnp.bfloat16)
        return _gmel_fused(attr, dT_b, bias_b, layer_params,
                           vmem_limit=vmem_limit)

    # tile_rows: 256 is a good default on v6e/v7x; 128 also fine on v5e.
    tv = _round_up(max(16, min(tile_rows, n)), 16)   # 16: bf16 sublane tile
    n_pad = _round_up(n, tv)
    pad = n_pad - n
    if pad:
        adjT = jnp.pad(adjT, ((0, pad), (0, pad)))   # padded nodes: no edges
        dT = jnp.pad(dT, ((0, pad), (0, pad)))
        attr = jnp.pad(attr, ((0, pad), (0, 0)))
    bias_b = jnp.where(adjT > 0, 0.0, -1e30).astype(jnp.bfloat16)
    dT_b = dT.astype(jnp.bfloat16)

    x = attr
    for (w1, w2, attn, w0) in layer_params:
        x = _gat_layer_tiled(x, dT_b, bias_b, w1, w2, attn, w0,
                             tv=tv, vmem_limit=vmem_limit)
    return x[:n]


# ----------------------------------------------------------------------------
# Pure-jnp reference (original orientation) for correctness checking.
# ----------------------------------------------------------------------------
def _gat_layer_ref(attr, w1, w2, attn, w0, adj, d):
    h_dim = w1.shape[1]
    z = attr @ w1
    z_i = attr @ w2
    a_src, a_dst, a_e = attn[:h_dim, 0], attn[h_dim:2 * h_dim, 0], attn[2 * h_dim, 0]
    t = d * w0[0, 0]
    e = (z @ a_src)[:, None] + (z @ a_dst)[None, :] + a_e * t
    e = jnp.where(e > 0, e, 0.01 * e)
    mask = adj > 0
    e_masked = jnp.where(mask, e, -1e30)
    e_max = jnp.max(e_masked, axis=0, keepdims=True)
    ex = jnp.where(mask, jnp.exp(e_masked - e_max), 0.0)
    alpha = ex / jnp.sum(ex, axis=0, keepdims=True)
    z_neighbor = alpha.T @ z
    return jnp.maximum(z_i + z_neighbor, 0.0)


def _init_layer_params(key, f_in, h_dim):
    k = jax.random.split(key, 4)
    w1 = jax.random.normal(k[0], (f_in, h_dim), jnp.float32) / math.sqrt(f_in)
    w2 = jax.random.normal(k[1], (f_in, h_dim), jnp.float32) / math.sqrt(f_in)
    attn = jax.random.normal(k[2], (2 * h_dim + 1, 1), jnp.float32) / math.sqrt(2 * h_dim + 1)
    w0 = jax.random.normal(k[3], (1, 1), jnp.float32)
    return (w1, w2, attn, w0)


def _make_graph(key, n):
    """Random edges + a ring so every node has in-degree >= 1."""
    k1, k2 = jax.random.split(key)
    rand_adj = (jax.random.uniform(k1, (n, n)) < 0.3).astype(jnp.float32)
    idx = jnp.arange(n)
    ring = jnp.zeros((n, n), jnp.float32).at[idx, (idx + 1) % n].set(1.0)
    adj = jnp.clip(rand_adj + ring, 0.0, 1.0)
    d = jax.random.uniform(k2, (n, n), jnp.float32) * adj
    return adj, d


def _check(out, ref, name):
    assert out.shape == ref.shape, (name, out.shape, ref.shape)
    assert bool(jnp.all(jnp.isfinite(out))), f"{name}: non-finite output"
    max_err = float(jnp.max(jnp.abs(out - ref)))
    scale = max(float(jnp.max(jnp.abs(ref))), 1.0)
    # bf16 MXU operands (f32 accumulation) over two stacked GAT layers:
    # validate to 5% of the output scale.
    assert max_err <= 5e-2 * scale, \
        f"{name}: max abs err {max_err:.4g} exceeds 5% of scale {scale:.4g}"


if __name__ == "__main__":
    in_dim, h_dim = 8, 32
    num_hidden_layers = 1                  # GAT = input layer + 1 hidden layer
    layer_dims = [(in_dim, h_dim)] + [(h_dim, h_dim)] * num_hidden_layers

    # --- case 1: fused single-block path (small graph) ---
    key = jax.random.PRNGKey(0)
    keys = jax.random.split(key, 8)
    N = 16
    attr = jax.random.normal(keys[0], (N, in_dim), jnp.float32)
    adj, d = _make_graph(keys[1], N)
    layer_params = [_init_layer_params(keys[3 + i], fi, fo)
                    for i, (fi, fo) in enumerate(layer_dims)]

    out = gmel_forward(attr, adj, d, layer_params)
    out = jax.block_until_ready(out)
    ref = attr
    for (w1, w2, attn, w0) in layer_params:
        ref = _gat_layer_ref(ref, w1, w2, attn, w0, adj, d)
    _check(out, ref, "fused")

    # --- case 2: destination-row-tiled path (forced, multi-tile grid) ---
    keys2 = jax.random.split(jax.random.PRNGKey(1), 8)
    N2 = 40
    attr2 = jax.random.normal(keys2[0], (N2, in_dim), jnp.float32)
    adj2, d2 = _make_graph(keys2[1], N2)
    layer_params2 = [_init_layer_params(keys2[3 + i], fi, fo)
                     for i, (fi, fo) in enumerate(layer_dims)]

    out2 = gmel_forward(attr2, adj2, d2, layer_params2,
                        force_tiled=True, tile_rows=16)
    out2 = jax.block_until_ready(out2)
    ref2 = attr2
    for (w1, w2, attn, w0) in layer_params2:
        ref2 = _gat_layer_ref(ref2, w1, w2, attn, w0, adj2, d2)
    _check(out2, ref2, "tiled")

    print("KERNEL_OK")
</pallas_src>

<mosaic_0001>
module attributes {stable_mosaic.version = 11 : i64} {
  func.func @_gmel_fused_kernel(%arg0: memref<2x1xf32, #tpu.memory_space<smem>>, %arg1: memref<16x8xf32, #tpu.memory_space<vmem>>, %arg2: memref<1x128xf32, #tpu.memory_space<vmem>>, %arg3: memref<16x16xbf16, #tpu.memory_space<vmem>>, %arg4: memref<16x16xbf16, #tpu.memory_space<vmem>>, %arg5: memref<8x128xbf16, #tpu.memory_space<vmem>>, %arg6: memref<1x32xf32, #tpu.memory_space<vmem>>, %arg7: memref<32x128xbf16, #tpu.memory_space<vmem>>, %arg8: memref<1x32xf32, #tpu.memory_space<vmem>>, %arg9: memref<16x32xf32, #tpu.memory_space<vmem>>) attributes {dimension_semantics = [], scalar_prefetch = 0 : i64, scratch_operands = 0 : i64, tpu.core_type = #tpu.core_type<tc>} {
    %c0 = arith.constant 0 : index
    %c0_0 = arith.constant 0 : index
    %0 = vector.load %arg2[%c0, %c0_0] : memref<1x128xf32, #tpu.memory_space<vmem>>, vector<1x128xf32>
    %c0_1 = arith.constant 0 : index
    %c0_2 = arith.constant 0 : index
    %1 = vector.load %arg1[%c0_1, %c0_2] : memref<16x8xf32, #tpu.memory_space<vmem>>, vector<16x8xf32>
    %c0_3 = arith.constant 0 : index
    %c0_4 = arith.constant 0 : index
    %2 = vector.load %arg5[%c0_3, %c0_4] : memref<8x128xbf16, #tpu.memory_space<vmem>>, vector<8x128xbf16>
    %c0_5 = arith.constant 0 : index
    %c0_6 = arith.constant 0 : index
    %3 = vector.load %arg6[%c0_5, %c0_6] : memref<1x32xf32, #tpu.memory_space<vmem>>, vector<1x32xf32>
    %c0_7 = arith.constant 0 : index
    %c0_8 = arith.constant 0 : index
    %4 = memref.load %arg0[%c0_7, %c0_8] : memref<2x1xf32, #tpu.memory_space<smem>>
    %5 = arith.truncf %1 : vector<16x8xf32> to vector<16x8xbf16>
    %cst = arith.constant dense<0.000000e+00> : vector<16x128xf32>
    %6 = tpu.matmul %5, %2, %cst {dimension_numbers = #tpu.dot_dimension_numbers<[1], [0], [0], [1], [0, 0, 1, 1], [], []>} : vector<16x8xbf16>, vector<8x128xbf16>, vector<16x128xf32> -> vector<16x128xf32>
    %7 = vector.extract_strided_slice %6 {offsets = [0, 0], sizes = [16, 32], strides = [1, 1]} : vector<16x128xf32> to vector<16x32xf32>
    %8 = vector.extract_strided_slice %6 {offsets = [0, 33], sizes = [16, 1], strides = [1, 1]} : vector<16x128xf32> to vector<16x1xf32>
    %9 = vector.extract_strided_slice %6 {offsets = [0, 34], sizes = [16, 32], strides = [1, 1]} : vector<16x128xf32> to vector<16x32xf32>
    %cst_9 = arith.constant dense<0.000000e+00> : vector<1x16xf32>
    %10 = tpu.matmul %3, %7, %cst_9 {dimension_numbers = #tpu.dot_dimension_numbers<[1], [1], [0], [0], [0, 0, 1, 0], [], []>} : vector<1x32xf32>, vector<16x32xf32>, vector<1x16xf32> -> vector<1x16xf32>
    %11 = vector.broadcast %8 : vector<16x1xf32> to vector<16x16xf32>
    %12 = vector.broadcast %10 : vector<1x16xf32> to vector<16x16xf32>
    %13 = arith.addf %11, %12 : vector<16x16xf32>
    %c0_10 = arith.constant 0 : index
    %c0_11 = arith.constant 0 : index
    %14 = vector.load %arg4[%c0_10, %c0_11] : memref<16x16xbf16, #tpu.memory_space<vmem>>, vector<16x16xbf16>
    %15 = arith.extf %14 : vector<16x16xbf16> to vector<16x16xf32>
    %16 = vector.broadcast %4 : f32 to vector<16x16xf32>
    %17 = arith.mulf %16, %15 : vector<16x16xf32>
    %18 = arith.addf %13, %17 : vector<16x16xf32>
    %cst_12 = arith.constant 0.000000e+00 : f32
    %19 = vector.broadcast %cst_12 : f32 to vector<16x16xf32>
    %20 = arith.cmpf ogt, %18, %19 : vector<16x16xf32>
    %cst_13 = arith.constant 0.00999999977 : f32
    %21 = vector.broadcast %cst_13 : f32 to vector<16x16xf32>
    %22 = arith.mulf %21, %18 : vector<16x16xf32>
    %23 = arith.select %20, %18, %22 : vector<16x16xi1>, vector<16x16xf32>
    %c0_14 = arith.constant 0 : index
    %c0_15 = arith.constant 0 : index
    %24 = vector.load %arg3[%c0_14, %c0_15] : memref<16x16xbf16, #tpu.memory_space<vmem>>, vector<16x16xbf16>
    %25 = arith.extf %24 : vector<16x16xbf16> to vector<16x16xf32>
    %26 = arith.addf %23, %25 : vector<16x16xf32>
    %cst_16 = arith.constant dense<0xFF800000> : vector<16xf32>
    %27 = vector.multi_reduction <maximumf>, %26, %cst_16 [1] : vector<16x16xf32> to vector<16xf32>
    %28 = vector.shape_cast %27 : vector<16xf32> to vector<16x1xf32>
    %29 = vector.broadcast %28 : vector<16x1xf32> to vector<16x16xf32>
    %30 = arith.subf %26, %29 : vector<16x16xf32>
    %31 = math.exp %30 : vector<16x16xf32>
    %32 = vector.broadcast %0 : vector<1x128xf32> to vector<16x128xf32>
    %33 = arith.addf %6, %32 : vector<16x128xf32>
    %34 = arith.truncf %33 : vector<16x128xf32> to vector<16x128xbf16>
    %35 = arith.truncf %31 : vector<16x16xf32> to vector<16x16xbf16>
    %cst_17 = arith.constant dense<0.000000e+00> : vector<16x128xf32>
    %36 = tpu.matmul %35, %34, %cst_17 {dimension_numbers = #tpu.dot_dimension_numbers<[1], [0], [0], [1], [0, 0, 1, 1], [], []>} : vector<16x16xbf16>, vector<16x128xbf16>, vector<16x128xf32> -> vector<16x128xf32>
    %37 = vector.extract_strided_slice %36 {offsets = [0, 0], sizes = [16, 32], strides = [1, 1]} : vector<16x128xf32> to vector<16x32xf32>
    %38 = vector.extract_strided_slice %36 {offsets = [0, 32], sizes = [16, 1], strides = [1, 1]} : vector<16x128xf32> to vector<16x1xf32>
    %39 = tpu.reciprocal %38 {approx = true} : vector<16x1xf32> -> vector<16x1xf32>
    %40 = vector.broadcast %39 : vector<16x1xf32> to vector<16x32xf32>
    %41 = arith.mulf %37, %40 : vector<16x32xf32>
    %42 = arith.addf %9, %41 : vector<16x32xf32>
    %cst_18 = arith.constant 0.000000e+00 : f32
    %43 = vector.broadcast %cst_18 : f32 to vector<16x32xf32>
    %44 = arith.maximumf %42, %43 : vector<16x32xf32>
    %c0_19 = arith.constant 0 : index
    %c0_20 = arith.constant 0 : index
    %45 = vector.load %arg7[%c0_19, %c0_20] : memref<32x128xbf16, #tpu.memory_space<vmem>>, vector<32x128xbf16>
    %c0_21 = arith.constant 0 : index
    %c0_22 = arith.constant 0 : index
    %46 = vector.load %arg8[%c0_21, %c0_22] : memref<1x32xf32, #tpu.memory_space<vmem>>, vector<1x32xf32>
    %c1 = arith.constant 1 : index
    %c0_23 = arith.constant 0 : index
    %47 = memref.load %arg0[%c1, %c0_23] : memref<2x1xf32, #tpu.memory_space<smem>>
    %48 = arith.truncf %44 : vector<16x32xf32> to vector<16x32xbf16>
    %cst_24 = arith.constant dense<0.000000e+00> : vector<16x128xf32>
    %49 = tpu.matmul %48, %45, %cst_24 {dimension_numbers = #tpu.dot_dimension_numbers<[1], [0], [0], [1], [0, 0, 1, 1], [], []>} : vector<16x32xbf16>, vector<32x128xbf16>, vector<16x128xf32> -> vector<16x128xf32>
    %50 = vector.extract_strided_slice %49 {offsets = [0, 0], sizes = [16, 32], strides = [1, 1]} : vector<16x128xf32> to vector<16x32xf32>
    %51 = vector.extract_strided_slice %49 {offsets = [0, 33], sizes = [16, 1], strides = [1, 1]} : vector<16x128xf32> to vector<16x1xf32>
    %52 = vector.extract_strided_slice %49 {offsets = [0, 34], sizes = [16, 32], strides = [1, 1]} : vector<16x128xf32> to vector<16x32xf32>
    %cst_25 = arith.constant dense<0.000000e+00> : vector<1x16xf32>
    %53 = tpu.matmul %46, %50, %cst_25 {dimension_numbers = #tpu.dot_dimension_numbers<[1], [1], [0], [0], [0, 0, 1, 0], [], []>} : vector<1x32xf32>, vector<16x32xf32>, vector<1x16xf32> -> vector<1x16xf32>
    %54 = vector.broadcast %51 : vector<16x1xf32> to vector<16x16xf32>
    %55 = vector.broadcast %53 : vector<1x16xf32> to vector<16x16xf32>
    %56 = arith.addf %54, %55 : vector<16x16xf32>
    %c0_26 = arith.constant 0 : index
    %c0_27 = arith.constant 0 : index
    %57 = vector.load %arg4[%c0_26, %c0_27] : memref<16x16xbf16, #tpu.memory_space<vmem>>, vector<16x16xbf16>
    %58 = arith.extf %57 : vector<16x16xbf16> to vector<16x16xf32>
    %59 = vector.broadcast %47 : f32 to vector<16x16xf32>
    %60 = arith.mulf %59, %58 : vector<16x16xf32>
    %61 = arith.addf %56, %60 : vector<16x16xf32>
    %cst_28 = arith.constant 0.000000e+00 : f32
    %62 = vector.broadcast %cst_28 : f32 to vector<16x16xf32>
    %63 = arith.cmpf ogt, %61, %62 : vector<16x16xf32>
    %cst_29 = arith.constant 0.00999999977 : f32
    %64 = vector.broadcast %cst_29 : f32 to vector<16x16xf32>
    %65 = arith.mulf %64, %61 : vector<16x16xf32>
    %66 = arith.select %63, %61, %65 : vector<16x16xi1>, vector<16x16xf32>
    %c0_30 = arith.constant 0 : index
    %c0_31 = arith.constant 0 : index
    %67 = vector.load %arg3[%c0_30, %c0_31] : memref<16x16xbf16, #tpu.memory_space<vmem>>, vector<16x16xbf16>
    %68 = arith.extf %67 : vector<16x16xbf16> to vector<16x16xf32>
    %69 = arith.addf %66, %68 : vector<16x16xf32>
    %cst_32 = arith.constant dense<0xFF800000> : vector<16xf32>
    %70 = vector.multi_reduction <maximumf>, %69, %cst_32 [1] : vector<16x16xf32> to vector<16xf32>
    %71 = vector.shape_cast %70 : vector<16xf32> to vector<16x1xf32>
    %72 = vector.broadcast %71 : vector<16x1xf32> to vector<16x16xf32>
    %73 = arith.subf %69, %72 : vector<16x16xf32>
    %74 = math.exp %73 : vector<16x16xf32>
    %75 = vector.broadcast %0 : vector<1x128xf32> to vector<16x128xf32>
    %76 = arith.addf %49, %75 : vector<16x128xf32>
    %77 = arith.truncf %76 : vector<16x128xf32> to vector<16x128xbf16>
    %78 = arith.truncf %74 : vector<16x16xf32> to vector<16x16xbf16>
    %cst_33 = arith.constant dense<0.000000e+00> : vector<16x128xf32>
    %79 = tpu.matmul %78, %77, %cst_33 {dimension_numbers = #tpu.dot_dimension_numbers<[1], [0], [0], [1], [0, 0, 1, 1], [], []>} : vector<16x16xbf16>, vector<16x128xbf16>, vector<16x128xf32> -> vector<16x128xf32>
    %80 = vector.extract_strided_slice %79 {offsets = [0, 0], sizes = [16, 32], strides = [1, 1]} : vector<16x128xf32> to vector<16x32xf32>
    %81 = vector.extract_strided_slice %79 {offsets = [0, 32], sizes = [16, 1], strides = [1, 1]} : vector<16x128xf32> to vector<16x1xf32>
    %82 = tpu.reciprocal %81 {approx = true} : vector<16x1xf32> -> vector<16x1xf32>
    %83 = vector.broadcast %82 : vector<16x1xf32> to vector<16x32xf32>
    %84 = arith.mulf %80, %83 : vector<16x32xf32>
    %85 = arith.addf %52, %84 : vector<16x32xf32>
    %cst_34 = arith.constant 0.000000e+00 : f32
    %86 = vector.broadcast %cst_34 : f32 to vector<16x32xf32>
    %87 = arith.maximumf %85, %86 : vector<16x32xf32>
    %c0_35 = arith.constant 0 : index
    %c0_36 = arith.constant 0 : index
    %88 = vector.load %arg9[%c0_35, %c0_36] : memref<16x32xf32, #tpu.memory_space<vmem>>, vector<16x32xf32>
    tpu.vector_store %arg9[%c0_35, %c0_36], %87 {strides = array<i32>} : memref<16x32xf32, #tpu.memory_space<vmem>>, vector<16x32xf32>,
    return
  }
}

</mosaic_0001>

<llo_original>
// kernel: tpu_custom_call.1
$region0: #{tpu_custom_call.1}
  #allocation0 [shape = 'u32[]', space=smem, size = 0x4, offset = 0x4, fixed_abs, tag = 'smem constant byte address 0x4 - core index']
  #allocation1 [shape = 'u32[144,128]{1,0:T(1,128)}', space=vmem, size = 0x12000, scoped, tag = 'internal scratch']
  %s0 = inlined_call_operand.vmem [shape: f32[2,1], index: 0, kind: input, shape index: {}]
  %s1 = inlined_call_operand.vmem [shape: f32[16,8], index: 1, kind: input, shape index: {}]
  %s2 = inlined_call_operand.hbm [shape: f32[1,128], index: 2, kind: input, shape index: {}]
  %s3 = inlined_call_operand.vmem [shape: bf16[16,16], index: 3, kind: input, shape index: {}]
  %s4 = inlined_call_operand.vmem [shape: bf16[16,16], index: 4, kind: input, shape index: {}]
  %s5 = inlined_call_operand.vmem [shape: bf16[8,128], index: 5, kind: input, shape index: {}]
  %s6 = inlined_call_operand.vmem [shape: f32[1,32], index: 6, kind: input, shape index: {}]
  %s7 = inlined_call_operand.vmem [shape: bf16[32,128], index: 7, kind: input, shape index: {}]
  %s8 = inlined_call_operand.vmem [shape: f32[1,32], index: 8, kind: input, shape index: {}]
  %s9 = inlined_call_operand.hbm [shape: f32[16,32], index: 9, kind: output, shape index: {}]
  %s10 = sld [smem:[#allocation0]]
  $region54: #{tpu_custom_call.1} parent=0
    _
  %s12 = ssub.s32 1, %s10
  %s13 = scalar_select 0, %s12, %s10
  $region1: #{tpu_custom_call.1} parent=0
    #allocation2 [shape = 'u8[1024]{0}', space=smem, size = 0x400, scoped, tag = 'input window, operand 0, single buffered']
    #allocation3 [shape = 's32[1]{0}', space=sflag, size = 0x4, scoped, tag = 'scoped memory for tpu_custom_call.1']
    #allocation4 [shape = 's32[1]{0}', space=sflag, size = 0x4, scoped, tag = 'scoped memory for tpu_custom_call.1']
    #allocation5 [shape = 's32[1]{0}', space=sflag, size = 0x4, scoped, tag = 'scoped memory for tpu_custom_call.1']
    #allocation6 [shape = 'u8[512]{0}', space=vmem, size = 0x400, scoped, tag = 'input window, operand 2, single buffered']
    #allocation7 [shape = 'u8[8192]{0}', space=vmem, size = 0x2000, scoped, tag = 'output window, operand 0, single buffered']
    %14 = vsyncpa [#allocation5], 0
    %15 = vsyncpa [#allocation3], 0
    %16 = vsyncpa [#allocation4], 0
    // Predicated region
    $region2: #{tpu_custom_call.1} parent=1 // pred_check
      _
    $region3: #{tpu_custom_call.1} parent=1 // pred_check_branch
      %18 = sbr.rel (0) target = $region5
    $region4: #{tpu_custom_call.1} parent=1 // pred_region
      %s20 = ssub.s32 32, 32
      %21 = vsyncadd [#allocation5], %s20
      %s23 = sshll.u32 %s0, 4
      %s24 = int_to_ptr.vmem [resolvable:$true] %s23
      %26 = dma.vmem_to_smem %s24, 32, [#allocation2], [#allocation5]
    $region5: #{tpu_custom_call.1} parent=1 // pred_fallthru
      _
    // Predicated region
    $region6: #{tpu_custom_call.1} parent=1 // pred_check
      _
    $region7: #{tpu_custom_call.1} parent=1 // pred_check_branch
      %28 = sbr.rel (0) target = $region9
    $region8: #{tpu_custom_call.1} parent=1 // pred_region
      _
    $region9: #{tpu_custom_call.1} parent=1 // pred_fallthru
      _
    // Predicated region
    $region10: #{tpu_custom_call.1} parent=1 // pred_check
      _
    $region11: #{tpu_custom_call.1} parent=1 // pred_check_branch
      %30 = sbr.rel (0) target = $region13
    $region12: #{tpu_custom_call.1} parent=1 // pred_region
      %s32 = ssub.s32 16, 16
      %33 = vsyncadd [#allocation3], %s32
      %s35 = sshll.u32 [#allocation6], 4
      %s36 = int_to_ptr.vmem [resolvable:$true] %s35
      %38 = dma.hbm_to_vmem [thread:$0]  %s2, 16, %s36, [#allocation3]
    $region13: #{tpu_custom_call.1} parent=1 // pred_fallthru
      _
    // Predicated region
    $region14: #{tpu_custom_call.1} parent=1 // pred_check
      _
    $region15: #{tpu_custom_call.1} parent=1 // pred_check_branch
      %40 = sbr.rel (0) target = $region17
    $region16: #{tpu_custom_call.1} parent=1 // pred_region
      _
    $region17: #{tpu_custom_call.1} parent=1 // pred_fallthru
      _
    // Predicated region
    $region18: #{tpu_custom_call.1} parent=1 // pred_check
      _
    $region19: #{tpu_custom_call.1} parent=1 // pred_check_branch
      %42 = sbr.rel (0) target = $region21
    $region20: #{tpu_custom_call.1} parent=1 // pred_region
      _
    $region21: #{tpu_custom_call.1} parent=1 // pred_fallthru
      _
    // Predicated region
    $region22: #{tpu_custom_call.1} parent=1 // pred_check
      _
    $region23: #{tpu_custom_call.1} parent=1 // pred_check_branch
      %44 = sbr.rel (0) target = $region25
    $region24: #{tpu_custom_call.1} parent=1 // pred_region
      _
    $region25: #{tpu_custom_call.1} parent=1 // pred_fallthru
      _
    // Predicated region
    $region26: #{tpu_custom_call.1} parent=1 // pred_check
      _
    $region27: #{tpu_custom_call.1} parent=1 // pred_check_branch
      %46 = sbr.rel (0) target = $region29
    $region28: #{tpu_custom_call.1} parent=1 // pred_region
      _
    $region29: #{tpu_custom_call.1} parent=1 // pred_fallthru
      _
    // Predicated region
    $region30: #{tpu_custom_call.1} parent=1 // pred_check
      _
    $region31: #{tpu_custom_call.1} parent=1 // pred_check_branch
      %48 = sbr.rel (0) target = $region33
    $region32: #{tpu_custom_call.1} parent=1 // pred_region
      _
    $region33: #{tpu_custom_call.1} parent=1 // pred_fallthru
      _
    // Predicated region
    $region34: #{tpu_custom_call.1} parent=1 // pred_check
      _
    $region35: #{tpu_custom_call.1} parent=1 // pred_check_branch
      %50 = sbr.rel (0) target = $region37
    $region36: #{tpu_custom_call.1} parent=1 // pred_region
      _
    $region37: #{tpu_custom_call.1} parent=1 // pred_fallthru
      _
    // Predicated region
    $region38: #{tpu_custom_call.1} parent=1 // pred_check
      _
    $region39: #{tpu_custom_call.1} parent=1 // pred_check_branch
      %52 = sbr.rel (0) target = $region41
    $region40: #{tpu_custom_call.1} parent=1 // pred_region
      %53 = dma.done [#allocation5], 32
    $region41: #{tpu_custom_call.1} parent=1 // pred_fallthru
      _
    // Predicated region
    $region42: #{tpu_custom_call.1} parent=1 // pred_check
      _
    $region43: #{tpu_custom_call.1} parent=1 // pred_check_branch
      %55 = sbr.rel (0) target = $region45
    $region44: #{tpu_custom_call.1} parent=1 // pred_region
      %56 = dma.done [#allocation3], 16
    $region45: #{tpu_custom_call.1} parent=1 // pred_fallthru
      _
    %57 = sfence
    %v59 = vld [vmem:[#allocation6] sm:$0x1]
    %v60 = vld [vmem:[%s1] sm:$0xff]
    %v61 = vld [vmem:[%s1 + $0x8] sm:$0xff]
    %v62 = vld [vmem:[%s5] sm:$0xf]
    %v63 = vld [vmem:[%s6] sm:$0x1]
    %s64 = sld [smem:[#allocation2]]
    %v65 = vpack.c.bf16 %v61, %v60
    %vm66 = vcmask 64512
    %v68 = vsel %vm66, %v65, 0
    %vm70 = vcmask 1043456
    %v72 = vsel %vm70, %v62, 0
    %74 = vmatprep.subr.bf16.mxu0 0
    %75 = vmatpush1.bf16.msra.mxu0 0
    %76 = vmatprep.subr.bf16.mxu0 0
    %77 = vmatpush1.bf16.msra.mxu0 0
    %78 = vmatprep.subr.bf16.mxu0 0
    %79 = vmatpush1.bf16.msra.mxu0 0
    %80 = vmatprep.subr.bf16.mxu0 0
    %81 = vmatpush1.bf16.msra.mxu0 0
    %82 = vmatprep.subr.bf16.mxu0 0
    %83 = vmatpush1.bf16.msra.mxu0 0
    %84 = vmatprep.subr.bf16.mxu0 0
    %85 = vmatpush1.bf16.msra.mxu0 0
    %86 = vmatprep.subr.bf16.mxu0 0
    %87 = vmatpush1.bf16.msra.mxu0 0
    %88 = vmatprep.subr.bf16.mxu0 0
    %89 = vmatpush1.bf16.msra.mxu0 %v72
    %90 = vmatprep.subr.bf16.mxu0 0
    %91 = vmatpush2.bf16.msra.mxu0 0
    %92 = vmatprep.subr.bf16.mxu0 0
    %93 = vmatpush2.bf16.msra.mxu0 0
    %94 = vmatprep.subr.bf16.mxu0 0
    %95 = vmatpush2.bf16.msra.mxu0 0
    %96 = vmatprep.subr.bf16.mxu0 0
    %97 = vmatpush2.bf16.msra.mxu0 0
    %98 = vmatprep.subr.bf16.mxu0 0
    %99 = vmatpush2.bf16.msra.mxu0 0
    %100 = vmatprep.subr.bf16.mxu0 0
    %101 = vmatpush2.bf16.msra.mxu0 0
    %102 = vmatprep.subr.bf16.mxu0 0
    %103 = vmatpush2.bf16.msra.mxu0 0
    %104 = vmatprep.subr.bf16.mxu0 0
    %105 = vmatpush2.bf16.msra.mxu0 0
    %106 = vmatprep.mubr.bf16.mxu0 0
    %107 = vmatmul.mubr.bf16.gmra.mxu0 %v68
    %v108 = vpop.f32.mrf.mxu0
    %v109 = vadd.f32 0.0, %v108
    %v110 = vpop.f32.mrf.mxu0
    %v111 = vpop.f32.mrf.mxu0
    %v112 = vadd.f32 0.0, %v111
    %v113 = vpop.f32.mrf.mxu0
    %114 = vdwg.mxu0
    %vm115 = vcmask 261120
    %v117 = vsel %vm115, %v63, 0
    %v120 = vsel %vm115, %v109, 0
    %v123 = vsel %vm115, %v112, 0
    %125 = vmatprep.subr.mxu0 0.0
    %126 = vmatpush1.xpose.msra.mxu0 0.0
    %127 = vmatprep.subr.mxu0 0.0
    %128 = vmatpush1.xpose.msra.mxu0 0.0
    %129 = vmatprep.subr.mxu0 0.0
    %130 = vmatpush1.xpose.msra.mxu0 0.0
    %131 = vmatprep.subr.mxu0 0.0
    %132 = vmatpush1.xpose.msra.mxu0 0.0
    %133 = vmatprep.subr.mxu0 0.0
    %134 = vmatpush1.xpose.msra.mxu0 0.0
    %135 = vmatprep.subr.mxu0 0.0
    %136 = vmatpush1.xpose.msra.mxu0 0.0
    %137 = vmatprep.subr.mxu0 0.0
    %138 = vmatpush1.xpose.msra.mxu0 0.0
    %139 = vmatprep.subr.mxu0 0.0
    %140 = vmatpush1.xpose.msra.mxu0 0.0
    %141 = vmatprep.subr.mxu0 0.0
    %142 = vmatpush1.xpose.msra.mxu0 0.0
    %143 = vmatprep.subr.mxu0 0.0
    %144 = vmatpush1.xpose.msra.mxu0 0.0
    %145 = vmatprep.subr.mxu0 0.0
    %146 = vmatpush1.xpose.msra.mxu0 0.0
    %147 = vmatprep.subr.mxu0 0.0
    %148 = vmatpush1.xpose.msra.mxu0 0.0
    %149 = vmatprep.subr.mxu0 0.0
    %150 = vmatpush1.xpose.msra.mxu0 0.0
    %151 = vmatprep.subr.mxu0 0.0
    %152 = vmatpush1.xpose.msra.mxu0 0.0
    %153 = vmatprep.subr.mxu0 0.0
    %154 = vmatpush1.xpose.msra.mxu0 %v123
    %155 = vmatprep.subr.mxu0 0.0
    %156 = vmatpush1.xpose.msra.mxu0 %v120
    %157 = vmatprep.subr.mxu0 0.0
    %158 = vmatpush2.xpose.msra.mxu0 0.0
    %159 = vmatprep.subr.mxu0 0.0
    %160 = vmatpush2.xpose.msra.mxu0 0.0
    %161 = vmatprep.subr.mxu0 0.0
    %162 = vmatpush2.xpose.msra.mxu0 0.0
    %163 = vmatprep.subr.mxu0 0.0
    %164 = vmatpush2.xpose.msra.mxu0 0.0
    %165 = vmatprep.subr.mxu0 0.0
    %166 = vmatpush2.xpose.msra.mxu0 0.0
    %167 = vmatprep.subr.mxu0 0.0
    %168 = vmatpush2.xpose.msra.mxu0 0.0
    %169 = vmatprep.subr.mxu0 0.0
    %170 = vmatpush2.xpose.msra.mxu0 0.0
    %171 = vmatprep.subr.mxu0 0.0
    %172 = vmatpush2.xpose.msra.mxu0 0.0
    %173 = vmatprep.subr.mxu0 0.0
    %174 = vmatpush2.xpose.msra.mxu0 0.0
    %175 = vmatprep.subr.mxu0 0.0
    %176 = vmatpush2.xpose.msra.mxu0 0.0
    %177 = vmatprep.subr.mxu0 0.0
    %178 = vmatpush2.xpose.msra.mxu0 0.0
    %179 = vmatprep.subr.mxu0 0.0
    %180 = vmatpush2.xpose.msra.mxu0 0.0
    %181 = vmatprep.subr.mxu0 0.0
    %182 = vmatpush2.xpose.msra.mxu0 0.0
    %183 = vmatprep.subr.mxu0 0.0
    %184 = vmatpush2.xpose.msra.mxu0 0.0
    %185 = vmatprep.subr.mxu0 0.0
    %186 = vmatpush2.xpose.msra.mxu0 0.0
    %187 = vmatprep.subr.mxu0 0.0
    %188 = vmatpush2.xpose.msra.mxu0 0.0
    %189 = vmatprep.mubr.f32.mxu0 0.0
    %190 = vmatmul.mubr.f32.gmra.mxu0 %v117
    %v191 = vpop.f32.mrf.mxu0
    %v192 = vadd.f32 0.0, %v191
    %v193 = vpop.f32.mrf.mxu0
    %194 = vdwg.mxu0
    %195 = vset.pattern.permute.xlu0 33
    %196 = vperm.xlu0 %195, %v109
    %v197 = vpop.permute.xlu0 %196
    %199 = vset.pattern.permute.xlu0 33
    %200 = vperm.xlu0 %199, %v112
    %v201 = vpop.permute.xlu0 %200
    %v203 = vlaneseq
    %v204 = vshrl.u32 %v203, 7
    %v205 = vsub.s32 0, %v204
    %v206 = vrot.slane %v192, %v205
    %v207 = vadd.f32 %v197, %v206
    %v208 = vadd.f32 %v201, %v206
    %v209 = vld [vmem:[%s4] sm:$0xf]
    %v210 = vld [vmem:[%s4 + $0x4] sm:$0xf]
    %v211 = vunpack.c.l.bf16 %v209
    %v212 = vunpack.c.l.bf16 %v210
    %v213 = vstv %s64
    %v214 = vmul.f32 %v213, %v211
    %v215 = vmul.f32 %v213, %v212
    %v216 = vadd.f32 %v207, %v214
    %v217 = vadd.f32 %v208, %v215
    %vm218 = vcmp.gt.f32.partialorder %v216, 0.0
    %vm219 = vcmp.gt.f32.partialorder %v217, 0.0
    %v220 = vmul.f32 %v216, 0.01
    %v221 = vmul.f32 %v217, 0.01
    %v222 = vsel %vm218, %v216, %v220
    %v223 = vsel %vm219, %v217, %v221
    %v224 = vld [vmem:[%s3] sm:$0xf]
    %v225 = vld [vmem:[%s3 + $0x4] sm:$0xf]
    %v226 = vunpack.c.l.bf16 %v224
    %v227 = vunpack.c.l.bf16 %v225
    %v228 = vadd.f32 %v222, %v226
    %v229 = vadd.f32 %v223, %v227
    %vm230 = vcmask 130048
    %v231 = vsel %vm230, %v228, -inf
    %232 = vmax.xlane.f32.xlu0 %v231
    %v233 = vpop.xlane.xlu0 %232
    %v234 = vsel %vm230, %v229, -inf
    %235 = vmax.xlane.f32.xlu0 %v234
    %v236 = vpop.xlane.xlu0 %235
    %v237 = vsub.f32 %v228, %v233
    %v238 = vsub.f32 %v229, %v236
    %v239 = vmul.f32 %v237, 1.442695
    %v240 = vpow.pop %v239
    %v241 = vmul.f32 %v238, 1.442695
    %v242 = vpow.pop %v241
    %v244 = vlaneseq
    %v245 = vshrl.u32 %v244, 7
    %v246 = vsub.s32 0, %v245
    %v247 = vrot.slane %v59, %v246
    %v249 = vadd.f32 %v109, %v247
    %v250 = vadd.f32 %v112, %v247
    %v251 = vpack.c.bf16 %v250, %v249
    %v252 = vpack.c.bf16 %v242, %v240
    %v254 = vsel %vm230, %v252, 0
    %256 = vmatprep.subr.bf16.mxu0 0
    %257 = vmatpush1.bf16.msra.mxu0 0
    %258 = vmatprep.subr.bf16.mxu0 0
    %259 = vmatpush1.bf16.msra.mxu0 0
    %260 = vmatprep.subr.bf16.mxu0 0
    %261 = vmatpush1.bf16.msra.mxu0 0
    %262 = vmatprep.subr.bf16.mxu0 0
    %263 = vmatpush1.bf16.msra.mxu0 0
    %264 = vmatprep.subr.bf16.mxu0 0
    %265 = vmatpush1.bf16.msra.mxu0 0
    %266 = vmatprep.subr.bf16.mxu0 0
    %267 = vmatpush1.bf16.msra.mxu0 0
    %268 = vmatprep.subr.bf16.mxu0 0
    %269 = vmatpush1.bf16.msra.mxu0 0
    %270 = vmatprep.subr.bf16.mxu0 0
    %271 = vmatpush1.bf16.msra.mxu0 %v251
    %272 = vmatprep.subr.bf16.mxu0 0
    %273 = vmatpush2.bf16.msra.mxu0 0
    %274 = vmatprep.subr.bf16.mxu0 0
    %275 = vmatpush2.bf16.msra.mxu0 0
    %276 = vmatprep.subr.bf16.mxu0 0
    %277 = vmatpush2.bf16.msra.mxu0 0
    %278 = vmatprep.subr.bf16.mxu0 0
    %279 = vmatpush2.bf16.msra.mxu0 0
    %280 = vmatprep.subr.bf16.mxu0 0
    %281 = vmatpush2.bf16.msra.mxu0 0
    %282 = vmatprep.subr.bf16.mxu0 0
    %283 = vmatpush2.bf16.msra.mxu0 0
    %284 = vmatprep.subr.bf16.mxu0 0
    %285 = vmatpush2.bf16.msra.mxu0 0
    %286 = vmatprep.subr.bf16.mxu0 0
    %287 = vmatpush2.bf16.msra.mxu0 0
    %288 = vmatprep.mubr.bf16.mxu0 0
    %289 = vmatmul.mubr.bf16.gmra.mxu0 %v254
    %v290 = vpop.f32.mrf.mxu0
    %v291 = vadd.f32 0.0, %v290
    %v292 = vpop.f32.mrf.mxu0
    %v293 = vpop.f32.mrf.mxu0
    %v294 = vadd.f32 0.0, %v293
    %v295 = vpop.f32.mrf.mxu0
    %296 = vdwg.mxu0
    %v297 = vrcp.pop %v291
    %v298 = vrcp.pop %v294
    %300 = vset.pattern.permute.xlu0 32
    %301 = vperm.xlu0 %300, %v297
    %v302 = vpop.permute.xlu0 %301
    %305 = vset.pattern.permute.xlu0 32
    %306 = vperm.xlu0 %305, %v298
    %v307 = vpop.permute.xlu0 %306
    %v309 = vmul.f32 %v291, %v302
    %v310 = vmul.f32 %v294, %v307
    %313 = vrot.lane.b32.xlu0 %v309, 34
    %v314 = vpop.permute.xlu0 %313
    %315 = vrot.lane.b32.xlu0 %v310, 34
    %v316 = vpop.permute.xlu0 %315
    %v319 = vadd.f32 %v109, %v314
    %v320 = vadd.f32 %v112, %v316
    %v321 = vmax.f32 %v319, 0.0
    %v322 = vmax.f32 %v320, 0.0
    %v323 = vld [vmem:[%s7] sm:$0xf]
    %v324 = vld [vmem:[%s7 + $0x4] sm:$0xf]
    %v325 = vld [vmem:[%s7 + $0x8] sm:$0xf]
    %v326 = vld [vmem:[%s7 + $0xc] sm:$0xf]
    %v327 = vld [vmem:[%s8] sm:$0x1]
    %s328 = sld [smem:[#allocation2 + $0x80]]
    %v329 = vpack.c.bf16 %v322, %v321
    %331 = vrot.lane.b32.xlu0 %v329, 94
    %v332 = vpop.permute.xlu0 %331
    %v337 = vunpack.c.l.b16 %v323
    %v338 = vunpack.c.l.b16 %v324
    %v339 = vunpack.c.l.b16 %v325
    %v340 = vunpack.c.l.b16 %v326
    %v341 = vpack.c.b16 %v338, %v337
    %v342 = vpack.c.b16 %v340, %v339
    %v346 = vsel %vm115, %v332, 0
    %348 = vmatprep.subr.bf16.mxu0 0
    %349 = vmatpush1.bf16.msra.mxu0 0
    %350 = vmatprep.subr.bf16.mxu0 0
    %351 = vmatpush1.bf16.msra.mxu0 0
    %352 = vmatprep.subr.bf16.mxu0 0
    %353 = vmatpush1.bf16.msra.mxu0 0
    %354 = vmatprep.subr.bf16.mxu0 0
    %355 = vmatpush1.bf16.msra.mxu0 0
    %356 = vmatprep.subr.bf16.mxu0 0
    %357 = vmatpush1.bf16.msra.mxu0 0
    %358 = vmatprep.subr.bf16.mxu0 0
    %359 = vmatpush1.bf16.msra.mxu0 0
    %360 = vmatprep.subr.bf16.mxu0 0
    %361 = vmatpush1.bf16.msra.mxu0 %v342
    %362 = vmatprep.subr.bf16.mxu0 0
    %363 = vmatpush1.bf16.msra.mxu0 %v341
    %364 = vmatprep.subr.bf16.mxu0 0
    %365 = vmatpush2.bf16.msra.mxu0 0
    %366 = vmatprep.subr.bf16.mxu0 0
    %367 = vmatpush2.bf16.msra.mxu0 0
    %368 = vmatprep.subr.bf16.mxu0 0
    %369 = vmatpush2.bf16.msra.mxu0 0
    %370 = vmatprep.subr.bf16.mxu0 0
    %371 = vmatpush2.bf16.msra.mxu0 0
    %372 = vmatprep.subr.bf16.mxu0 0
    %373 = vmatpush2.bf16.msra.mxu0 0
    %374 = vmatprep.subr.bf16.mxu0 0
    %375 = vmatpush2.bf16.msra.mxu0 0
    %376 = vmatprep.subr.bf16.mxu0 0
    %377 = vmatpush2.bf16.msra.mxu0 0
    %378 = vmatprep.subr.bf16.mxu0 0
    %379 = vmatpush2.bf16.msra.mxu0 0
    %380 = vmatprep.mubr.bf16.mxu0 0
    %381 = vmatmul.mubr.bf16.gmra.mxu0 %v346
    %v382 = vpop.f32.mrf.mxu0
    %v383 = vadd.f32 0.0, %v382
    %v384 = vpop.f32.mrf.mxu0
    %v385 = vpop.f32.mrf.mxu0
    %v386 = vadd.f32 0.0, %v385
    %v387 = vpop.f32.mrf.mxu0
    %388 = vdwg.mxu0
    %v390 = vsel %vm115, %v327, 0
    %v393 = vsel %vm115, %v383, 0
    %v396 = vsel %vm115, %v386, 0
    %398 = vmatprep.subr.mxu0 0.0
    %399 = vmatpush1.xpose.msra.mxu0 0.0
    %400 = vmatprep.subr.mxu0 0.0
    %401 = vmatpush1.xpose.msra.mxu0 0.0
    %402 = vmatprep.subr.mxu0 0.0
    %403 = vmatpush1.xpose.msra.mxu0 0.0
    %404 = vmatprep.subr.mxu0 0.0
    %405 = vmatpush1.xpose.msra.mxu0 0.0
    %406 = vmatprep.subr.mxu0 0.0
    %407 = vmatpush1.xpose.msra.mxu0 0.0
    %408 = vmatprep.subr.mxu0 0.0
    %409 = vmatpush1.xpose.msra.mxu0 0.0
    %410 = vmatprep.subr.mxu0 0.0
    %411 = vmatpush1.xpose.msra.mxu0 0.0
    %412 = vmatprep.subr.mxu0 0.0
    %413 = vmatpush1.xpose.msra.mxu0 0.0
    %414 = vmatprep.subr.mxu0 0.0
    %415 = vmatpush1.xpose.msra.mxu0 0.0
    %416 = vmatprep.subr.mxu0 0.0
    %417 = vmatpush1.xpose.msra.mxu0 0.0
    %418 = vmatprep.subr.mxu0 0.0
    %419 = vmatpush1.xpose.msra.mxu0 0.0
    %420 = vmatprep.subr.mxu0 0.0
    %421 = vmatpush1.xpose.msra.mxu0 0.0
    %422 = vmatprep.subr.mxu0 0.0
    %423 = vmatpush1.xpose.msra.mxu0 0.0
    %424 = vmatprep.subr.mxu0 0.0
    %425 = vmatpush1.xpose.msra.mxu0 0.0
    %426 = vmatprep.subr.mxu0 0.0
    %427 = vmatpush1.xpose.msra.mxu0 %v396
    %428 = vmatprep.subr.mxu0 0.0
    %429 = vmatpush1.xpose.msra.mxu0 %v393
    %430 = vmatprep.subr.mxu0 0.0
    %431 = vmatpush2.xpose.msra.mxu0 0.0
    %432 = vmatprep.subr.mxu0 0.0
    %433 = vmatpush2.xpose.msra.mxu0 0.0
    %434 = vmatprep.subr.mxu0 0.0
    %435 = vmatpush2.xpose.msra.mxu0 0.0
    %436 = vmatprep.subr.mxu0 0.0
    %437 = vmatpush2.xpose.msra.mxu0 0.0
    %438 = vmatprep.subr.mxu0 0.0
    %439 = vmatpush2.xpose.msra.mxu0 0.0
    %440 = vmatprep.subr.mxu0 0.0
    %441 = vmatpush2.xpose.msra.mxu0 0.0
    %442 = vmatprep.subr.mxu0 0.0
    %443 = vmatpush2.xpose.msra.mxu0 0.0
    %444 = vmatprep.subr.mxu0 0.0
    %445 = vmatpush2.xpose.msra.mxu0 0.0
    %446 = vmatprep.subr.mxu0 0.0
    %447 = vmatpush2.xpose.msra.mxu0 0.0
    %448 = vmatprep.subr.mxu0 0.0
    %449 = vmatpush2.xpose.msra.mxu0 0.0
    %450 = vmatprep.subr.mxu0 0.0
    %451 = vmatpush2.xpose.msra.mxu0 0.0
    %452 = vmatprep.subr.mxu0 0.0
    %453 = vmatpush2.xpose.msra.mxu0 0.0
    %454 = vmatprep.subr.mxu0 0.0
    %455 = vmatpush2.xpose.msra.mxu0 0.0
    %456 = vmatprep.subr.mxu0 0.0
    %457 = vmatpush2.xpose.msra.mxu0 0.0
    %458 = vmatprep.subr.mxu0 0.0
    %459 = vmatpush2.xpose.msra.mxu0 0.0
    %460 = vmatprep.subr.mxu0 0.0
    %461 = vmatpush2.xpose.msra.mxu0 0.0
    %462 = vmatprep.mubr.f32.mxu0 0.0
    %463 = vmatmul.mubr.f32.gmra.mxu0 %v390
    %v464 = vpop.f32.mrf.mxu0
    %v465 = vadd.f32 0.0, %v464
    %v466 = vpop.f32.mrf.mxu0
    %467 = vdwg.mxu0
    %468 = vset.pattern.permute.xlu0 33
    %469 = vperm.xlu0 %468, %v383
    %v470 = vpop.permute.xlu0 %469
    %472 = vset.pattern.permute.xlu0 33
    %473 = vperm.xlu0 %472, %v386
    %v474 = vpop.permute.xlu0 %473
    %v476 = vlaneseq
    %v477 = vshrl.u32 %v476, 7
    %v478 = vsub.s32 0, %v477
    %v479 = vrot.slane %v465, %v478
    %v480 = vadd.f32 %v470, %v479
    %v481 = vadd.f32 %v474, %v479
    %v482 = vstv %s328
    %v483 = vmul.f32 %v482, %v211
    %v484 = vmul.f32 %v482, %v212
    %v485 = vadd.f32 %v480, %v483
    %v486 = vadd.f32 %v481, %v484
    %vm487 = vcmp.gt.f32.partialorder %v485, 0.0
    %vm488 = vcmp.gt.f32.partialorder %v486, 0.0
    %v489 = vmul.f32 %v485, 0.01
    %v490 = vmul.f32 %v486, 0.01
    %v491 = vsel %vm487, %v485, %v489
    %v492 = vsel %vm488, %v486, %v490
    %v493 = vadd.f32 %v491, %v226
    %v494 = vadd.f32 %v492, %v227
    %v495 = vsel %vm230, %v493, -inf
    %496 = vmax.xlane.f32.xlu0 %v495
    %v497 = vpop.xlane.xlu0 %496
    %v498 = vsel %vm230, %v494, -inf
    %499 = vmax.xlane.f32.xlu0 %v498
    %v500 = vpop.xlane.xlu0 %499
    %v501 = vsub.f32 %v493, %v497
    %v502 = vsub.f32 %v494, %v500
    %v503 = vmul.f32 %v501, 1.442695
    %v504 = vpow.pop %v503
    %v505 = vmul.f32 %v502, 1.442695
    %v506 = vpow.pop %v505
    %v507 = vadd.f32 %v383, %v247
    %v508 = vadd.f32 %v386, %v247
    %v509 = vpack.c.bf16 %v508, %v507
    %v510 = vpack.c.bf16 %v506, %v504
    %v512 = vsel %vm230, %v510, 0
    %514 = vmatprep.subr.bf16.mxu0 0
    %515 = vmatpush1.bf16.msra.mxu0 0
    %516 = vmatprep.subr.bf16.mxu0 0
    %517 = vmatpush1.bf16.msra.mxu0 0
    %518 = vmatprep.subr.bf16.mxu0 0
    %519 = vmatpush1.bf16.msra.mxu0 0
    %520 = vmatprep.subr.bf16.mxu0 0
    %521 = vmatpush1.bf16.msra.mxu0 0
    %522 = vmatprep.subr.bf16.mxu0 0
    %523 = vmatpush1.bf16.msra.mxu0 0
    %524 = vmatprep.subr.bf16.mxu0 0
    %525 = vmatpush1.bf16.msra.mxu0 0
    %526 = vmatprep.subr.bf16.mxu0 0
    %527 = vmatpush1.bf16.msra.mxu0 0
    %528 = vmatprep.subr.bf16.mxu0 0
    %529 = vmatpush1.bf16.msra.mxu0 %v509
    %530 = vmatprep.subr.bf16.mxu0 0
    %531 = vmatpush2.bf16.msra.mxu0 0
    %532 = vmatprep.subr.bf16.mxu0 0
    %533 = vmatpush2.bf16.msra.mxu0 0
    %534 = vmatprep.subr.bf16.mxu0 0
    %535 = vmatpush2.bf16.msra.mxu0 0
    %536 = vmatprep.subr.bf16.mxu0 0
    %537 = vmatpush2.bf16.msra.mxu0 0
    %538 = vmatprep.subr.bf16.mxu0 0
    %539 = vmatpush2.bf16.msra.mxu0 0
    %540 = vmatprep.subr.bf16.mxu0 0
    %541 = vmatpush2.bf16.msra.mxu0 0
    %542 = vmatprep.subr.bf16.mxu0 0
    %543 = vmatpush2.bf16.msra.mxu0 0
    %544 = vmatprep.subr.bf16.mxu0 0
    %545 = vmatpush2.bf16.msra.mxu0 0
    %546 = vmatprep.mubr.bf16.mxu0 0
    %547 = vmatmul.mubr.bf16.gmra.mxu0 %v512
    %v548 = vpop.f32.mrf.mxu0
    %v549 = vadd.f32 0.0, %v548
    %v550 = vpop.f32.mrf.mxu0
    %v551 = vpop.f32.mrf.mxu0
    %v552 = vadd.f32 0.0, %v551
    %v553 = vpop.f32.mrf.mxu0
    %554 = vdwg.mxu0
    %v555 = vrcp.pop %v549
    %v556 = vrcp.pop %v552
    %558 = vset.pattern.permute.xlu0 32
    %559 = vperm.xlu0 %558, %v555
    %v560 = vpop.permute.xlu0 %559
    %563 = vset.pattern.permute.xlu0 32
    %564 = vperm.xlu0 %563, %v556
    %v565 = vpop.permute.xlu0 %564
    %v567 = vmul.f32 %v549, %v560
    %v568 = vmul.f32 %v552, %v565
    %571 = vrot.lane.b32.xlu0 %v567, 34
    %v572 = vpop.permute.xlu0 %571
    %573 = vrot.lane.b32.xlu0 %v568, 34
    %v574 = vpop.permute.xlu0 %573
    %v577 = vadd.f32 %v383, %v572
    %v578 = vadd.f32 %v386, %v574
    %v579 = vmax.f32 %v577, 0.0
    %v580 = vmax.f32 %v578, 0.0
    %583 = vrot.lane.b32.xlu0 %v579, 94
    %v584 = vpop.permute.xlu0 %583
    %585 = vrot.lane.b32.xlu0 %v580, 94
    %v586 = vpop.permute.xlu0 %585
    %589 = vst.msk [vmem:[#allocation7] sm:$0xff] %vm115, %v584
    %590 = vst.msk [vmem:[#allocation7 + $0x8] sm:$0xff] %vm115, %v586
    // Predicated region
    $region46: #{tpu_custom_call.1} parent=1 // pred_check
      _
    $region47: #{tpu_custom_call.1} parent=1 // pred_check_branch
      %592 = sbr.rel (0) target = $region49
    $region48: #{tpu_custom_call.1} parent=1 // pred_region
      %s594 = ssub.s32 256, 256
      %595 = vsyncadd [#allocation4], %s594
      %s596 = sshll.u32 [#allocation7], 4
      %s597 = int_to_ptr.vmem [resolvable:$true] %s596
      %602 = dma.vmem_to_hbm [thread:$0]  %s597, 256, %s9, [#allocation4], 128, 128, 8
    $region49: #{tpu_custom_call.1} parent=1 // pred_fallthru
      _
    // Predicated region
    $region50: #{tpu_custom_call.1} parent=1 // pred_check
      _
    $region51: #{tpu_custom_call.1} parent=1 // pred_check_branch
      %604 = sbr.rel (0) target = $region53
    $region52: #{tpu_custom_call.1} parent=1 // pred_region
      %605 = dma.done [#allocation4], 256
    $region53: #{tpu_custom_call.1} parent=1 // pred_fallthru
      _
    %606 = vsyncpa [#allocation3], 1
    %607 = vsyncpa [#allocation4], 1
    %608 = vsyncpa [#allocation5], 1

</llo_original>
